<compile_context>
chip_gen: v7x
topology: tpu7x:2x2x1
jax: 0.10.0
libtpu: 0.0.40
codegen_flags: <defaults>
</compile_context>

<pallas_src>
import functools
import math

import jax
import jax.numpy as jnp
import numpy as np
from jax import lax
from jax.experimental import pallas as pl
from jax.experimental.pallas import tpu as pltpu


def _round_up(x, m):
    return ((x + m - 1) // m) * m


def _diversity_kernel(f_row_ref, pm_row_ref, rowstats_ref,
                      f_col_ref, logpc_col_ref, colstats_ref, out_ref):
    """Partial of  sum_{i,j} m_i m_j ||f_i - f_j||^2 (h_i - p_i . log p_j)  for one
    (row-tile, col-tile) pair.  Row mask is pre-folded into hm / pm; column mask is a
    single maskr multiply.  The i == j terms self-cancel, so no diagonal mask is built."""
    f32 = jnp.float32
    j = pl.program_id(1)

    @pl.when(j == 0)
    def _():
        out_ref[...] = jnp.zeros_like(out_ref)

    f_t = f_row_ref[...]                 # (TM, D) bf16, L2-normalized features
    pm_t = pm_row_ref[...]               # (TM, K) bf16, mask_i * p_i
    hm_t = rowstats_ref[:, 0:1]          # (TM, 1) f32,  mask_i * sum_k p_ik logpc_ik
    fsq_t = rowstats_ref[:, 1:2]         # (TM, 1) f32,  ||f_i||^2 (from bf16 f)

    f_c = f_col_ref[...]                 # (TN, D) bf16
    lpc_c = logpc_col_ref[...]           # (TN, K) bf16, centered log-probs (+log C)
    fsq_c = colstats_ref[0:1, :]         # (1, TN) f32
    maskr = colstats_ref[1:2, :]         # (1, TN) f32

    dims = (((1,), (1,)), ((), ()))      # contract over the lane axis -> MXU
    gram = lax.dot_general(f_t, f_c, dims, preferred_element_type=f32)   # (TM, TN)
    A = lax.dot_general(pm_t, lpc_c, dims, preferred_element_type=f32)   # (TM, TN)

    feat_d = jnp.maximum(fsq_t + fsq_c - 2.0 * gram, 0.0)
    F = feat_d * maskr                                                   # (TM, TN)
    rsumF = jnp.sum(F, axis=1, keepdims=True)                            # (TM, 1)
    contrib = (jnp.sum(hm_t * rsumF, axis=0, keepdims=True)
               - jnp.sum(jnp.sum(F * A, axis=1, keepdims=True),
                         axis=0, keepdims=True))                         # (1, 1)

    sub = lax.broadcasted_iota(jnp.int32, (8, 128), 0)
    lane = lax.broadcasted_iota(jnp.int32, (8, 128), 1)
    out_ref[...] += jnp.where((sub == 0) & (lane == 0), contrib, 0.0).astype(f32)


def categorical_entropy_reg_loss(features, targets, mask, *, num_classes=32,
                                 lambda_d=0.1, lambda_t=0.1,
                                 row_tile=256, col_tile=1024,
                                 vmem_limit_bytes=48 * 1024 * 1024):
    """JAX/Pallas equivalent of CategoricalEntropyRegLoss.forward (fixed shapes, jittable)."""
    f32 = jnp.float32
    bf16 = jnp.bfloat16
    eps = 1e-10

    features = jnp.asarray(features, f32)
    targets = jnp.asarray(targets, f32)
    maskf = jnp.asarray(mask).astype(f32).reshape(-1)

    B, D = features.shape
    K = targets.shape[1]
    C = num_classes
    nd = K // C
    assert nd * C == K
    logC = math.log(float(C))

    # ---------------- XLA prologue (runs exactly once; hoisted out of the grid) ----------
    sq = jnp.sum(features * features, axis=1, keepdims=True)
    f = features * lax.rsqrt(jnp.maximum(sq, 1e-24))            # (B, D) f32, L2-normalized
    f_bf = f.astype(bf16)
    # ||f||^2 from the bf16-rounded f so the (untracked) pairwise-distance diagonal ~ 0.
    fsq = jnp.sum(jnp.square(f_bf.astype(f32)), axis=1)         # (B,)

    t3 = targets.reshape(B, nd, C) + eps
    p3 = t3 / jnp.sum(t3, axis=-1, keepdims=True)
    logpc3 = jnp.log(p3) + logC                                  # centered: O(1), bf16-safe
    p = p3.reshape(B, K)
    logpc = logpc3.reshape(B, K)
    h = jnp.sum(p * logpc, axis=1)                               # (B,)
    hm = h * maskf                                               # row mask folded here
    pm_bf = (p * maskf[:, None]).astype(bf16)                    # and here
    logpc_bf = logpc.astype(bf16)

    # -------- tightness / centers / count: exact closed form, plain f32 XLA, once --------
    #   sum_{d,i,c} W_ic ||f_i - mu_c||^2 = sum_i rowsumW_i ||f_i||^2 - sum_c colsum_c ||mu_c||^2
    W = targets * maskf[:, None]
    rowsumW = jnp.sum(W, axis=1)
    fsq32 = jnp.sum(f * f, axis=1)
    colsum = jnp.sum(W, axis=0)
    safe = jnp.where(colsum > 0.0, colsum, 1.0)
    centers = jnp.dot((W / safe).T, f)                           # (K, D) f32 (runs once)
    csq = jnp.sum(centers * centers, axis=1)
    tight_num = jnp.sum(rowsumW * fsq32) - jnp.sum(colsum * csq)
    has_any = jnp.any((targets.reshape(B, nd, C) > 0.0)
                      & (maskf[:, None, None] > 0.0), axis=-1)   # (B, nd)
    count = jnp.sum(has_any.astype(f32))

    # ---------------- tiling (rows "parallel", columns "arbitrary" reduction) ------------
    B8 = _round_up(max(B, 1), 8)
    TM = _round_up(int(min(row_tile, B8)), 8)
    M_pad = _round_up(max(B, 1), TM)
    TN = int(min(col_tile, M_pad))
    TN = max(TM, (TN // TM) * TM)                                # TN multiple of TM
    M_pad = _round_up(M_pad, TN)
    if TN != M_pad and TN % 128 != 0:
        TN = M_pad                                               # lane-constraint fallback
    num_i = M_pad // TM
    num_j = M_pad // TN
    pad = M_pad - B

    def padr(x):
        return jnp.pad(x, ((0, pad), (0, 0)))

    f_p = padr(f_bf)                                             # (M_pad, D) bf16
    pm_p = padr(pm_bf)                                           # (M_pad, K) bf16
    logpc_p = padr(logpc_bf)                                     # (M_pad, K) bf16
    rowstats = jnp.zeros((M_pad, 8), f32)
    rowstats = rowstats.at[:B, 0].set(hm).at[:B, 1].set(fsq)
    colstats = jnp.zeros((8, M_pad), f32)
    colstats = colstats.at[0, :B].set(fsq).at[1, :B].set(maskf)

    parts = pl.pallas_call(
        _diversity_kernel,
        out_shape=jax.ShapeDtypeStruct((num_i * 8, 128), f32),
        grid=(num_i, num_j),
        in_specs=[
            pl.BlockSpec((TM, D), lambda i, j: (i, 0)),          # f  (row tile)
            pl.BlockSpec((TM, K), lambda i, j: (i, 0)),          # masked p (row tile)
            pl.BlockSpec((TM, 8), lambda i, j: (i, 0)),          # row stats [hm, fsq]
            pl.BlockSpec((TN, D), lambda i, j: (j, 0)),          # f  (col tile)
            pl.BlockSpec((TN, K), lambda i, j: (j, 0)),          # centered log p (col tile)
            pl.BlockSpec((8, TN), lambda i, j: (0, j)),          # col stats [fsq, mask]
        ],
        out_specs=pl.BlockSpec((8, 128), lambda i, j: (i, 0)),
        compiler_params=pltpu.CompilerParams(
            dimension_semantics=("parallel", "arbitrary"),
            vmem_limit_bytes=vmem_limit_bytes),
    )(f_p, pm_p, rowstats, f_p, logpc_p, colstats)

    n = jnp.sum(maskf)
    div_num = jnp.sum(parts[:, 0])

    # O(1) final normalization / lambda combination stays in the (jittable) wrapper.
    diversity = jnp.where(
        n > 1.0,
        -div_num / (nd * jnp.maximum(n * (n - 1.0), 1.0)),
        jnp.float32(0.0))
    tightness = jnp.where(count > 0.0,
                          tight_num / jnp.maximum(count, 1.0),
                          jnp.float32(0.0))
    total = lambda_d * diversity + lambda_t * tightness
    return total, diversity, tightness


def _reference(features, targets, mask, num_classes, lambda_d, lambda_t):
    """Pure NumPy reference mirroring the PyTorch module (float64)."""
    feats = np.asarray(features, np.float64)
    targs = np.asarray(targets, np.float64)
    m = np.asarray(mask, bool)
    norms = np.sqrt((feats ** 2).sum(-1, keepdims=True))
    fn = feats / np.maximum(norms, 1e-12)
    vf, vt = fn[m], targs[m]
    M = vf.shape[0]
    C = num_classes
    nd = vt.shape[1] // C

    if M > 1:
        diff = vf[:, None, :] - vf[None, :, :]
        feat_d = (diff ** 2).sum(-1)
        tds = []
        for d in range(nd):
            p = vt[:, d * C:(d + 1) * C] + 1e-10
            p = p / p.sum(1, keepdims=True)
            lp = np.log(p)
            kl = np.zeros((M, M))
            for j in range(M):
                pj, lpj = p[j:j + 1], lp[j:j + 1]
                kl_pq = (pj * (lpj - lp)).sum(1)
                kl_qp = (p * (lp - lpj)).sum(1)
                kl[j] = (kl_pq + kl_qp) / 2
            tds.append(kl)
        td = np.mean(np.stack(tds), axis=0)
        od = ~np.eye(M, dtype=bool)
        div = -(feat_d * td * od).sum() / (M * (M - 1))
    else:
        div = 0.0

    t_losses = []
    for d in range(nd):
        W = vt[:, d * C:(d + 1) * C]
        centers = {}
        for c in range(C):
            w = W[:, c]
            if w.sum() > 0:
                centers[c] = (vf * (w / w.sum())[:, None]).sum(0)
        for i in range(M):
            sample = []
            for c in range(C):
                if c in centers and W[i, c] > 0:
                    dvec = vf[i] - centers[c]
                    sample.append(W[i, c] * (dvec ** 2).sum())
            if sample:
                t_losses.append(np.sum(sample))
    tight = float(np.mean(t_losses)) if t_losses else 0.0
    total = lambda_d * div + lambda_t * tight
    return total, div, tight


if __name__ == "__main__":
    key = jax.random.PRNGKey(0)
    k1, k2 = jax.random.split(key)

    B, D = 8, 32
    num_classes, num_dims = 32, 2
    lambda_d = lambda_t = 0.1

    features = jax.random.normal(k1, (B, D), dtype=jnp.float32)
    logits = jax.random.normal(k2, (B, num_dims, num_classes), dtype=jnp.float32)
    targets = jax.nn.softmax(logits, axis=-1).reshape(B, num_dims * num_classes)
    mask = jnp.array([True, True, False, True, True, True, False, True])

    loss_fn = jax.jit(functools.partial(
        categorical_entropy_reg_loss,
        num_classes=num_classes, lambda_d=lambda_d, lambda_t=lambda_t))

    total, div, tight = loss_fn(features, targets, mask)
    jax.block_until_ready((total, div, tight))

    ref_total, ref_div, ref_tight = _reference(
        features, targets, mask, num_classes, lambda_d, lambda_t)
    # bf16 MXU operands (f32 accumulation) in the diversity term -> slightly loose tolerance.
    np.testing.assert_allclose(float(total), ref_total, rtol=4e-2, atol=1e-2)
    np.testing.assert_allclose(float(div), ref_div, rtol=4e-2, atol=1e-2)
    np.testing.assert_allclose(float(tight), ref_tight, rtol=4e-2, atol=1e-2)

    print("KERNEL_OK")
</pallas_src>

<mosaic_0001>
module attributes {stable_mosaic.version = 11 : i64} {
  func.func @_diversity_kernel(%arg0: i32, %arg1: i32, %arg2: memref<8x32xbf16, #tpu.memory_space<vmem>>, %arg3: memref<8x64xbf16, #tpu.memory_space<vmem>>, %arg4: memref<8x8xf32, #tpu.memory_space<vmem>>, %arg5: memref<8x32xbf16, #tpu.memory_space<vmem>>, %arg6: memref<8x64xbf16, #tpu.memory_space<vmem>>, %arg7: memref<8x8xf32, #tpu.memory_space<vmem>>, %arg8: memref<8x128xf32, #tpu.memory_space<vmem>>) attributes {dimension_semantics = [#tpu.dimension_semantics<parallel>, #tpu.dimension_semantics<arbitrary>], iteration_bounds = array<i64: 1, 1>, scalar_prefetch = 0 : i64, scratch_operands = 0 : i64, tpu.core_type = #tpu.core_type<tc>, window_params = [{transform_indices = @transform_0, window_bounds = array<i64: 8, 32>}, {transform_indices = @transform_1, window_bounds = array<i64: 8, 64>}, {transform_indices = @transform_2, window_bounds = array<i64: 8, 8>}, {transform_indices = @transform_3, window_bounds = array<i64: 8, 32>}, {transform_indices = @transform_4, window_bounds = array<i64: 8, 64>}, {transform_indices = @transform_5, window_bounds = array<i64: 8, 8>}, {transform_indices = @transform_6, window_bounds = array<i64: 8, 128>}]} {
    %c0_i32 = arith.constant 0 : i32
    %0 = arith.cmpi eq, %arg1, %c0_i32 : i32
    %1 = arith.extui %0 : i1 to i32
    %c0_i32_0 = arith.constant 0 : i32
    %2 = arith.cmpi ne, %1, %c0_i32_0 : i32
    scf.if %2 {
      %cst_29 = arith.constant 0.000000e+00 : f32
      %48 = vector.broadcast %cst_29 : f32 to vector<8x128xf32>
      %c0_30 = arith.constant 0 : index
      %c0_31 = arith.constant 0 : index
      %49 = vector.load %arg8[%c0_30, %c0_31] : memref<8x128xf32, #tpu.memory_space<vmem>>, vector<8x128xf32>
      tpu.vector_store %arg8[%c0_30, %c0_31], %48 {strides = array<i32>} : memref<8x128xf32, #tpu.memory_space<vmem>>, vector<8x128xf32>,
    } else {
    }
    %c0 = arith.constant 0 : index
    %c0_1 = arith.constant 0 : index
    %3 = vector.load %arg2[%c0, %c0_1] : memref<8x32xbf16, #tpu.memory_space<vmem>>, vector<8x32xbf16>
    %c0_2 = arith.constant 0 : index
    %c0_3 = arith.constant 0 : index
    %4 = vector.load %arg3[%c0_2, %c0_3] : memref<8x64xbf16, #tpu.memory_space<vmem>>, vector<8x64xbf16>
    %c0_4 = arith.constant 0 : index
    %c0_5 = arith.constant 0 : index
    %5 = vector.load %arg4[%c0_4, %c0_5] : memref<8x8xf32, #tpu.memory_space<vmem>>, vector<8x1xf32>
    %c0_6 = arith.constant 0 : index
    %c1 = arith.constant 1 : index
    %6 = vector.load %arg4[%c0_6, %c1] : memref<8x8xf32, #tpu.memory_space<vmem>>, vector<8x1xf32>
    %c0_7 = arith.constant 0 : index
    %c0_8 = arith.constant 0 : index
    %7 = vector.load %arg5[%c0_7, %c0_8] : memref<8x32xbf16, #tpu.memory_space<vmem>>, vector<8x32xbf16>
    %c0_9 = arith.constant 0 : index
    %c0_10 = arith.constant 0 : index
    %8 = vector.load %arg6[%c0_9, %c0_10] : memref<8x64xbf16, #tpu.memory_space<vmem>>, vector<8x64xbf16>
    %c0_11 = arith.constant 0 : index
    %c0_12 = arith.constant 0 : index
    %9 = vector.load %arg7[%c0_11, %c0_12] : memref<8x8xf32, #tpu.memory_space<vmem>>, vector<1x8xf32>
    %c1_13 = arith.constant 1 : index
    %c0_14 = arith.constant 0 : index
    %10 = vector.load %arg7[%c1_13, %c0_14] : memref<8x8xf32, #tpu.memory_space<vmem>>, vector<1x8xf32>
    %cst = arith.constant dense<0.000000e+00> : vector<8x8xf32>
    %11 = tpu.matmul %3, %7, %cst {dimension_numbers = #tpu.dot_dimension_numbers<[1], [1], [0], [0], [0, 0, 1, 0], [], []>} : vector<8x32xbf16>, vector<8x32xbf16>, vector<8x8xf32> -> vector<8x8xf32>
    %cst_15 = arith.constant dense<0.000000e+00> : vector<8x8xf32>
    %12 = tpu.matmul %4, %8, %cst_15 {dimension_numbers = #tpu.dot_dimension_numbers<[1], [1], [0], [0], [0, 0, 1, 0], [], []>} : vector<8x64xbf16>, vector<8x64xbf16>, vector<8x8xf32> -> vector<8x8xf32>
    %13 = vector.broadcast %6 : vector<8x1xf32> to vector<8x8xf32>
    %14 = vector.broadcast %9 : vector<1x8xf32> to vector<8x8xf32>
    %15 = arith.addf %13, %14 : vector<8x8xf32>
    %cst_16 = arith.constant 2.000000e+00 : f32
    %16 = vector.broadcast %cst_16 : f32 to vector<8x8xf32>
    %17 = arith.mulf %16, %11 : vector<8x8xf32>
    %18 = arith.subf %15, %17 : vector<8x8xf32>
    %cst_17 = arith.constant 0.000000e+00 : f32
    %19 = vector.broadcast %cst_17 : f32 to vector<8x8xf32>
    %20 = arith.maximumf %18, %19 : vector<8x8xf32>
    %21 = vector.broadcast %10 : vector<1x8xf32> to vector<8x8xf32>
    %22 = arith.mulf %20, %21 : vector<8x8xf32>
    %cst_18 = arith.constant dense<0.000000e+00> : vector<8xf32>
    %23 = vector.multi_reduction <add>, %22, %cst_18 [1] : vector<8x8xf32> to vector<8xf32>
    %24 = vector.shape_cast %23 : vector<8xf32> to vector<8x1xf32>
    %25 = arith.mulf %5, %24 : vector<8x1xf32>
    %cst_19 = arith.constant dense<0.000000e+00> : vector<1xf32>
    %26 = vector.multi_reduction <add>, %25, %cst_19 [0] : vector<8x1xf32> to vector<1xf32>
    %27 = vector.shape_cast %26 : vector<1xf32> to vector<1x1xf32>
    %28 = arith.mulf %22, %12 : vector<8x8xf32>
    %cst_20 = arith.constant dense<0.000000e+00> : vector<8xf32>
    %29 = vector.multi_reduction <add>, %28, %cst_20 [1] : vector<8x8xf32> to vector<8xf32>
    %30 = vector.shape_cast %29 : vector<8xf32> to vector<8x1xf32>
    %cst_21 = arith.constant dense<0.000000e+00> : vector<1xf32>
    %31 = vector.multi_reduction <add>, %30, %cst_21 [0] : vector<8x1xf32> to vector<1xf32>
    %32 = vector.shape_cast %31 : vector<1xf32> to vector<1x1xf32>
    %33 = arith.subf %27, %32 : vector<1x1xf32>
    %34 = tpu.iota {dimensions = array<i32: 0>} : vector<8x128xi32>
    %35 = tpu.iota {dimensions = array<i32: 1>} : vector<8x128xi32>
    %c0_22 = arith.constant 0 : index
    %c0_23 = arith.constant 0 : index
    %36 = vector.load %arg8[%c0_22, %c0_23] : memref<8x128xf32, #tpu.memory_space<vmem>>, vector<8x128xf32>
    %c0_i32_24 = arith.constant 0 : i32
    %37 = vector.broadcast %c0_i32_24 : i32 to vector<8x128xi32>
    %38 = arith.cmpi eq, %34, %37 : vector<8x128xi32>
    %c0_i32_25 = arith.constant 0 : i32
    %39 = vector.broadcast %c0_i32_25 : i32 to vector<8x128xi32>
    %40 = arith.cmpi eq, %35, %39 : vector<8x128xi32>
    %41 = arith.andi %38, %40 : vector<8x128xi1>
    %cst_26 = arith.constant 0.000000e+00 : f32
    %42 = vector.shape_cast %33 : vector<1x1xf32> to vector<1x1xf32>
    %43 = vector.broadcast %42 : vector<1x1xf32> to vector<8x128xf32>
    %44 = vector.broadcast %cst_26 : f32 to vector<8x128xf32>
    %45 = arith.select %41, %43, %44 : vector<8x128xi1>, vector<8x128xf32>
    %46 = arith.addf %36, %45 : vector<8x128xf32>
    %c0_27 = arith.constant 0 : index
    %c0_28 = arith.constant 0 : index
    %47 = vector.load %arg8[%c0_27, %c0_28] : memref<8x128xf32, #tpu.memory_space<vmem>>, vector<8x128xf32>
    tpu.vector_store %arg8[%c0_27, %c0_28], %46 {strides = array<i32>} : memref<8x128xf32, #tpu.memory_space<vmem>>, vector<8x128xf32>,
    return
  }
  func.func @transform_0(%arg0: i32, %arg1: i32) -> (i32, i32) {
    %c0_i32 = arith.constant 0 : i32
    %c0_i32_0 = arith.constant 0 : i32
    return %arg0, %c0_i32 : i32, i32
  }
  func.func @transform_1(%arg0: i32, %arg1: i32) -> (i32, i32) {
    %c0_i32 = arith.constant 0 : i32
    %c0_i32_0 = arith.constant 0 : i32
    return %arg0, %c0_i32 : i32, i32
  }
  func.func @transform_2(%arg0: i32, %arg1: i32) -> (i32, i32) {
    %c0_i32 = arith.constant 0 : i32
    %c0_i32_0 = arith.constant 0 : i32
    return %arg0, %c0_i32 : i32, i32
  }
  func.func @transform_3(%arg0: i32, %arg1: i32) -> (i32, i32) {
    %c0_i32 = arith.constant 0 : i32
    %c0_i32_0 = arith.constant 0 : i32
    return %arg1, %c0_i32 : i32, i32
  }
  func.func @transform_4(%arg0: i32, %arg1: i32) -> (i32, i32) {
    %c0_i32 = arith.constant 0 : i32
    %c0_i32_0 = arith.constant 0 : i32
    return %arg1, %c0_i32 : i32, i32
  }
  func.func @transform_5(%arg0: i32, %arg1: i32) -> (i32, i32) {
    %c0_i32 = arith.constant 0 : i32
    %c0_i32_0 = arith.constant 0 : i32
    return %c0_i32, %arg1 : i32, i32
  }
  func.func @transform_6(%arg0: i32, %arg1: i32) -> (i32, i32) {
    %c0_i32 = arith.constant 0 : i32
    %c0_i32_0 = arith.constant 0 : i32
    return %arg0, %c0_i32 : i32, i32
  }
}

</mosaic_0001>

<llo_original>
// kernel: categorical_entropy_reg_loss.1
$region0: #{categorical_entropy_reg_loss.1}
  #allocation0 [shape = 'u32[]', space=smem, size = 0x4, offset = 0x4, fixed_abs, tag = 'smem constant byte address 0x4 - core index']
  #allocation1 [shape = 'u32[144,128]{1,0:T(1,128)}', space=vmem, size = 0x12000, scoped, tag = 'internal scratch']
  %s0 = inlined_call_operand.vmem [shape: bf16[8,32], index: 0, kind: input, shape index: {}, may-alias: {0,3}]
  %s1 = inlined_call_operand.vmem [shape: bf16[8,64], index: 1, kind: input, shape index: {}]
  %s2 = inlined_call_operand.vmem [shape: f32[8,8], index: 2, kind: input, shape index: {}]
  %s3 = inlined_call_operand.vmem [shape: bf16[8,32], index: 3, kind: input, shape index: {}, may-alias: {0,3}]
  %s4 = inlined_call_operand.vmem [shape: bf16[8,64], index: 4, kind: input, shape index: {}]
  %s5 = inlined_call_operand.vmem [shape: f32[8,8], index: 5, kind: input, shape index: {}]
  %s6 = inlined_call_operand.vmem [shape: f32[8,128], index: 6, kind: output, shape index: {}]
  %s7 = sld [smem:[#allocation0]]
  $region38: #{categorical_entropy_reg_loss.1} parent=0
    _
  %s9 = ssub.s32 1, %s7
  %s10 = scalar_select 0, %s9, %s7
  // Predicated region
  $region2: #{categorical_entropy_reg_loss.1} parent=0 // pred_check
    _
  $region3: #{categorical_entropy_reg_loss.1} parent=0 // pred_check_branch
    %12 = sbr.rel (0) target = $region5
  $region4: #{categorical_entropy_reg_loss.1} parent=0 // pred_region
    _
  $region5: #{categorical_entropy_reg_loss.1} parent=0 // pred_fallthru
    _
  // Predicated region
  $region6: #{categorical_entropy_reg_loss.1} parent=0 // pred_check
    _
  $region7: #{categorical_entropy_reg_loss.1} parent=0 // pred_check_branch
    %14 = sbr.rel (0) target = $region9
  $region8: #{categorical_entropy_reg_loss.1} parent=0 // pred_region
    _
  $region9: #{categorical_entropy_reg_loss.1} parent=0 // pred_fallthru
    _
  // Predicated region
  $region10: #{categorical_entropy_reg_loss.1} parent=0 // pred_check
    _
  $region11: #{categorical_entropy_reg_loss.1} parent=0 // pred_check_branch
    %16 = sbr.rel (0) target = $region13
  $region12: #{categorical_entropy_reg_loss.1} parent=0 // pred_region
    _
  $region13: #{categorical_entropy_reg_loss.1} parent=0 // pred_fallthru
    _
  // Predicated region
  $region14: #{categorical_entropy_reg_loss.1} parent=0 // pred_check
    _
  $region15: #{categorical_entropy_reg_loss.1} parent=0 // pred_check_branch
    %18 = sbr.rel (0) target = $region17
  $region16: #{categorical_entropy_reg_loss.1} parent=0 // pred_region
    _
  $region17: #{categorical_entropy_reg_loss.1} parent=0 // pred_fallthru
    _
  // Predicated region
  $region18: #{categorical_entropy_reg_loss.1} parent=0 // pred_check
    _
  $region19: #{categorical_entropy_reg_loss.1} parent=0 // pred_check_branch
    %20 = sbr.rel (0) target = $region21
  $region20: #{categorical_entropy_reg_loss.1} parent=0 // pred_region
    _
  $region21: #{categorical_entropy_reg_loss.1} parent=0 // pred_fallthru
    _
  // Predicated region
  $region22: #{categorical_entropy_reg_loss.1} parent=0 // pred_check
    _
  $region23: #{categorical_entropy_reg_loss.1} parent=0 // pred_check_branch
    %22 = sbr.rel (0) target = $region25
  $region24: #{categorical_entropy_reg_loss.1} parent=0 // pred_region
    _
  $region25: #{categorical_entropy_reg_loss.1} parent=0 // pred_fallthru
    _
  %p24 = scmp.eq.s32.totalorder 0, 0
  // Predicated region
  $region26: #{categorical_entropy_reg_loss.1} parent=0 // pred_check
    %p25 = pneg %p24
  $region27: #{categorical_entropy_reg_loss.1} parent=0 // pred_check_branch
    %27 = sbr.rel (%p25) target = $region29
  $region28: #{categorical_entropy_reg_loss.1} parent=0 // pred_region
    %28 = vst [vmem:[%s6] sm:$0xff] 0.0
  $region29: #{categorical_entropy_reg_loss.1} parent=0 // pred_fallthru
    _
  %v29 = vld [vmem:[%s0] sm:$0xf]
  %v30 = vld [vmem:[%s1] sm:$0xf]
  %v31 = vld [vmem:[%s2] sm:$0xff]
  %v32 = vld [vmem:[%s3] sm:$0xf]
  %v33 = vld [vmem:[%s4] sm:$0xf]
  %v34 = vld [vmem:[%s5] sm:$0x1]
  %v35 = vld [vmem:[%s5 + $0x1] sm:$0x1]
  %vm36 = vcmask 261120
  %v38 = vsel %vm36, %v29, 0
  %v41 = vsel %vm36, %v32, 0
  %43 = vmatprep.subr.bf16.mxu0 0
  %44 = vmatpush1.bf16.xpose.msra.mxu0 %v41
  %45 = vmatprep.subr.bf16.mxu0 0
  %46 = vmatpush1.bf16.xpose.msra.mxu0 0
  %47 = vmatprep.subr.bf16.mxu0 0
  %48 = vmatpush1.bf16.xpose.msra.mxu0 0
  %49 = vmatprep.subr.bf16.mxu0 0
  %50 = vmatpush1.bf16.xpose.msra.mxu0 0
  %51 = vmatprep.subr.bf16.mxu0 0
  %52 = vmatpush1.bf16.xpose.msra.mxu0 0
  %53 = vmatprep.subr.bf16.mxu0 0
  %54 = vmatpush1.bf16.xpose.msra.mxu0 0
  %55 = vmatprep.subr.bf16.mxu0 0
  %56 = vmatpush1.bf16.xpose.msra.mxu0 0
  %57 = vmatprep.subr.bf16.mxu0 0
  %58 = vmatpush1.bf16.xpose.msra.mxu0 0
  %59 = vmatprep.subr.bf16.mxu0 0
  %60 = vmatpush1.bf16.xpose.msra.mxu0 0
  %61 = vmatprep.subr.bf16.mxu0 0
  %62 = vmatpush1.bf16.xpose.msra.mxu0 0
  %63 = vmatprep.subr.bf16.mxu0 0
  %64 = vmatpush1.bf16.xpose.msra.mxu0 0
  %65 = vmatprep.subr.bf16.mxu0 0
  %66 = vmatpush1.bf16.xpose.msra.mxu0 0
  %67 = vmatprep.subr.bf16.mxu0 0
  %68 = vmatpush1.bf16.xpose.msra.mxu0 0
  %69 = vmatprep.subr.bf16.mxu0 0
  %70 = vmatpush1.bf16.xpose.msra.mxu0 0
  %71 = vmatprep.subr.bf16.mxu0 0
  %72 = vmatpush1.bf16.xpose.msra.mxu0 0
  %73 = vmatprep.subr.bf16.mxu0 0
  %74 = vmatpush1.bf16.xpose.msra.mxu0 0
  %75 = vmatprep.mubr.bf16.mxu0 0
  %76 = vmatmul.mubr.bf16.gmra.mrb[0].mxu0 %v38
  %v77 = vpop.f32.mrb[0].mxu0
  %v78 = vadd.f32 0.0, %v77
  %v79 = vpop.f32.mrb[0].mxu0
  %v80 = vpop.f32.mrb[0].mxu0
  %v81 = vpop.f32.mrb[0].mxu0
  %82 = vdwg.mxu0
  %vm83 = vcmask 523264
  %v85 = vsel %vm83, %v30, 0
  %v88 = vsel %vm83, %v33, 0
  %90 = vmatprep.subr.bf16.mxu0 0
  %91 = vmatpush1.bf16.xpose.msra.mxu0 %v88
  %92 = vmatprep.subr.bf16.mxu0 0
  %93 = vmatpush1.bf16.xpose.msra.mxu0 0
  %94 = vmatprep.subr.bf16.mxu0 0
  %95 = vmatpush1.bf16.xpose.msra.mxu0 0
  %96 = vmatprep.subr.bf16.mxu0 0
  %97 = vmatpush1.bf16.xpose.msra.mxu0 0
  %98 = vmatprep.subr.bf16.mxu0 0
  %99 = vmatpush1.bf16.xpose.msra.mxu0 0
  %100 = vmatprep.subr.bf16.mxu0 0
  %101 = vmatpush1.bf16.xpose.msra.mxu0 0
  %102 = vmatprep.subr.bf16.mxu0 0
  %103 = vmatpush1.bf16.xpose.msra.mxu0 0
  %104 = vmatprep.subr.bf16.mxu0 0
  %105 = vmatpush1.bf16.xpose.msra.mxu0 0
  %106 = vmatprep.subr.bf16.mxu0 0
  %107 = vmatpush1.bf16.xpose.msra.mxu0 0
  %108 = vmatprep.subr.bf16.mxu0 0
  %109 = vmatpush1.bf16.xpose.msra.mxu0 0
  %110 = vmatprep.subr.bf16.mxu0 0
  %111 = vmatpush1.bf16.xpose.msra.mxu0 0
  %112 = vmatprep.subr.bf16.mxu0 0
  %113 = vmatpush1.bf16.xpose.msra.mxu0 0
  %114 = vmatprep.subr.bf16.mxu0 0
  %115 = vmatpush1.bf16.xpose.msra.mxu0 0
  %116 = vmatprep.subr.bf16.mxu0 0
  %117 = vmatpush1.bf16.xpose.msra.mxu0 0
  %118 = vmatprep.subr.bf16.mxu0 0
  %119 = vmatpush1.bf16.xpose.msra.mxu0 0
  %120 = vmatprep.subr.bf16.mxu0 0
  %121 = vmatpush1.bf16.xpose.msra.mxu0 0
  %122 = vmatprep.mubr.bf16.mxu0 0
  %123 = vmatmul.mubr.bf16.gmra.mrb[0].mxu0 %v85
  %v124 = vpop.f32.mrb[0].mxu0
  %v125 = vadd.f32 0.0, %v124
  %v126 = vpop.f32.mrb[0].mxu0
  %v127 = vpop.f32.mrb[0].mxu0
  %v128 = vpop.f32.mrb[0].mxu0
  %129 = vdwg.mxu0
  %131 = vset.pattern.permute.xlu0 1
  %132 = vperm.xlu0 %131, %v31
  %v133 = vpop.permute.xlu0 %132
  %v135 = vlaneseq
  %v136 = vshrl.u32 %v135, 7
  %v137 = vsub.s32 0, %v136
  %v138 = vrot.slane %v34, %v137
  %v139 = vadd.f32 %v133, %v138
  %v140 = vmul.f32 %v78, 2.0
  %v141 = vsub.f32 %v139, %v140
  %v142 = vmax.f32 %v141, 0.0
  %v143 = vlaneseq
  %v144 = vshrl.u32 %v143, 7
  %v145 = vsub.s32 0, %v144
  %v146 = vrot.slane %v35, %v145
  %v147 = vmul.f32 %v142, %v146
  %vm148 = vcmask 64512
  %v149 = vsel %vm148, %v147, 0.0
  %150 = vadd.xlane.f32.xlu0 %v149
  %v151 = vpop.xlane.xlu0 %150
  %v152 = vmul.f32 %v31, %v151
  %vm153 = vcmask 7168
  %v154 = vsel %vm153, %v152, 0.0
  %v155 = vrot.slane %v154, 4
  %v156 = vadd.f32 %v154, %v155
  %v157 = vrot.slane %v156, 2
  %v158 = vadd.f32 %v156, %v157
  %v159 = vrot.slane %v158, 1
  %v160 = vadd.f32 %v158, %v159
  %v161 = vmul.f32 %v147, %v125
  %v162 = vsel %vm148, %v161, 0.0
  %163 = vadd.xlane.f32.xlu0 %v162
  %v164 = vpop.xlane.xlu0 %163
  %v165 = vrot.slane %v164, 4
  %v166 = vadd.f32 %v164, %v165
  %v167 = vrot.slane %v166, 2
  %v168 = vadd.f32 %v166, %v167
  %v169 = vrot.slane %v168, 1
  %v170 = vadd.f32 %v168, %v169
  %v171 = vsub.f32 %v160, %v170
  %v172 = vlaneseq
  %v173 = vshrl.u32 %v172, 7
  %v174 = vlaneseq
  %v175 = vand.u32 %v174, 127
  %v176 = vld [vmem:[%s6] sm:$0xff]
  %vm177 = vcmp.eq.s32.totalorder %v173, 0
  %vm178 = vcmp.eq.s32.totalorder %v175, 0
  %vm179 = vmand %vm177, %vm178
  %181 = vset.pattern.permute.xlu0 0
  %182 = vperm.xlu0 %181, %v171
  %v183 = vpop.permute.xlu0 %182
  %v185 = vsel %vm179, %v183, 0.0
  %v186 = vadd.f32 %v176, %v185
  %187 = vst [vmem:[%s6] sm:$0xff] %v186
  // Predicated region
  $region30: #{categorical_entropy_reg_loss.1} parent=0 // pred_check
    _
  $region31: #{categorical_entropy_reg_loss.1} parent=0 // pred_check_branch
    %189 = sbr.rel (0) target = $region33
  $region32: #{categorical_entropy_reg_loss.1} parent=0 // pred_region
    _
  $region33: #{categorical_entropy_reg_loss.1} parent=0 // pred_fallthru
    _
  // Predicated region
  $region34: #{categorical_entropy_reg_loss.1} parent=0 // pred_check
    _
  $region35: #{categorical_entropy_reg_loss.1} parent=0 // pred_check_branch
    %191 = sbr.rel (0) target = $region37
  $region36: #{categorical_entropy_reg_loss.1} parent=0 // pred_region
    _
  $region37: #{categorical_entropy_reg_loss.1} parent=0 // pred_fallthru
    _

</llo_original>
